<compile_context>
chip_gen: v7x
topology: tpu7x:2x2x1
jax: 0.10.0
libtpu: 0.0.40
codegen_flags: <defaults>
</compile_context>

<pallas_src>
import jax
import jax.numpy as jnp
from jax.experimental import pallas as pl
from jax.experimental.pallas import tpu as pltpu


def _round_up(x: int, m: int) -> int:
    return ((x + m - 1) // m) * m


def bridge_kernel(x_ref, w_ref, b_ref, o_ref):
    # bf16 x bf16 -> f32 on the MXU; bias add + tanh in f32 on the VPU/EUP.
    acc = jnp.dot(x_ref[...], w_ref[...], preferred_element_type=jnp.float32)
    o_ref[...] = jnp.tanh(acc + b_ref[...]).astype(o_ref.dtype)


def bridge_layer(x, w_t, b, *, tm=512, tn=512):
    """tanh(x @ w_t + b).

    x:   (M, K)  float (cast to bf16 for the MXU)
    w_t: (K, N)  bf16, N a multiple of 128 (padded at init)
    b:   (1, N)  f32
    returns (M, N) f32
    """
    M, K = x.shape
    Kw, N = w_t.shape
    assert K == Kw and b.shape == (1, N)
    assert N % 128 == 0, "pad weight/bias to a lane-dense (multiple of 128) width"

    # Row tile: multiple of 8, never larger than the (padded) problem needs.
    tm = min(tm, _round_up(M, 8))
    grid_m = pl.cdiv(M, tm)
    m_pad = grid_m * tm

    # Lane tile: multiple of 128 that divides N (keeps unmasked, lane-dense stores).
    if N <= tn:
        tn = N
    else:
        tn = next(c for c in (512, 384, 256, 128) if N % c == 0)
    grid_n = N // tn

    x_bf16 = x.astype(jnp.bfloat16)
    if m_pad != M:
        x_bf16 = jnp.pad(x_bf16, ((0, m_pad - M), (0, 0)))

    cost = pl.CostEstimate(
        flops=2 * m_pad * K * N,
        transcendentals=m_pad * N,
        bytes_accessed=m_pad * K * 2 + K * N * 2 + N * 4 + m_pad * N * 4,
    )

    out = pl.pallas_call(
        bridge_kernel,
        out_shape=jax.ShapeDtypeStruct((m_pad, N), jnp.float32),
        grid_spec=pltpu.PrefetchScalarGridSpec(
            num_scalar_prefetch=0,
            grid=(grid_m, grid_n),
            in_specs=[
                pl.BlockSpec((tm, K), lambda i, j: (i, 0)),   # activation row tile
                pl.BlockSpec((K, tn), lambda i, j: (0, j)),   # weight column tile
                pl.BlockSpec((1, tn), lambda i, j: (0, j)),   # bias column tile
            ],
            out_specs=pl.BlockSpec((tm, tn), lambda i, j: (i, j)),
        ),
        compiler_params=pltpu.CompilerParams(
            dimension_semantics=("parallel", "parallel"),
        ),
        cost_estimate=cost,
    )(x_bf16, w_t, b)

    return out[:M] if m_pad != M else out


class EncoderDecoderBridge:
    """JAX/Pallas equivalent of EncoderDecoder's bridge_layer.

    The PyTorch EncoderDecoder.forward raises NotImplementedError (parent class),
    so only the bridge projection defined in __init__ is implemented here.
    """
    # TODO(synk): encoder/decoder submodules and subclass-specific forward logic are
    # intentionally not implemented (the parent forward raises NotImplementedError).

    def __init__(self, encoder_output_size, decoder_hidden_size, key):
        kw, kb = jax.random.split(key)
        # Deterministic init mimicking nn.Linear default (uniform +/- 1/sqrt(fan_in)).
        bound = 1.0 / float(encoder_output_size) ** 0.5
        n_pad = _round_up(decoder_hidden_size, 128)   # lane-dense output width
        w = jax.random.uniform(
            kw, (encoder_output_size, decoder_hidden_size),
            dtype=jnp.float32, minval=-bound, maxval=bound)
        bias = jax.random.uniform(
            kb, (1, decoder_hidden_size),
            dtype=jnp.float32, minval=-bound, maxval=bound)
        # Weight pre-transposed (in, out), zero-padded to a multiple of 128 lanes,
        # stored as bf16 for the MXU (accumulation stays f32 in the kernel).
        self.w_t = jnp.pad(
            w, ((0, 0), (0, n_pad - decoder_hidden_size))).astype(jnp.bfloat16)
        self.b = jnp.pad(bias, ((0, 0), (0, n_pad - decoder_hidden_size)))
        self.out_features = decoder_hidden_size

    def __call__(self, encoder_out):
        # encoder_out: (batch, seq, encoder_output_size)
        B, S, K = encoder_out.shape
        x2d = encoder_out.reshape(B * S, K)
        y2d = bridge_layer(x2d, self.w_t, self.b)
        return y2d[:, :self.out_features].reshape(B, S, self.out_features)


if __name__ == "__main__":
    key = jax.random.PRNGKey(0)
    k_x, k_params = jax.random.split(key)

    batch, seq = 2, 8
    encoder_output_size = 32   # encoder.output_size
    decoder_hidden_size = 32   # decoder.hidden_size

    # Synthetic encoder output (stand-in for self.encoder(...) activations).
    encoder_out = jax.random.normal(
        k_x, (batch, seq, encoder_output_size), dtype=jnp.float32)

    model = EncoderDecoderBridge(encoder_output_size, decoder_hidden_size, k_params)

    y = model(encoder_out)
    jax.block_until_ready(y)

    # Reference in plain JAX, mirroring the kernel's bf16 inputs / f32 accumulate.
    x2d = encoder_out.reshape(-1, encoder_output_size)
    ref = jnp.tanh(
        x2d.astype(jnp.bfloat16).astype(jnp.float32) @ model.w_t.astype(jnp.float32)
        + model.b)[:, :decoder_hidden_size]
    ref = ref.reshape(batch, seq, decoder_hidden_size)

    assert y.shape == (batch, seq, decoder_hidden_size)
    # bf16 matmul inputs -> loosened tolerance vs. pure-f32 math.
    assert jnp.allclose(y, ref, atol=2e-2, rtol=2e-2)

    print("KERNEL_OK")
</pallas_src>

<mosaic_0001>
module attributes {stable_mosaic.version = 11 : i64} {
  func.func @bridge_kernel(%arg0: i32, %arg1: i32, %arg2: memref<16x32xbf16, #tpu.memory_space<vmem>>, %arg3: memref<32x128xbf16, #tpu.memory_space<vmem>>, %arg4: memref<1x128xf32, #tpu.memory_space<vmem>>, %arg5: memref<16x128xf32, #tpu.memory_space<vmem>>) attributes {dimension_semantics = [#tpu.dimension_semantics<parallel>, #tpu.dimension_semantics<parallel>], iteration_bounds = array<i64: 1, 1>, scalar_prefetch = 0 : i64, scratch_operands = 0 : i64, tpu.core_type = #tpu.core_type<tc>, window_params = [{transform_indices = @transform_0, window_bounds = array<i64: 16, 32>}, {transform_indices = @transform_1, window_bounds = array<i64: 32, 128>}, {transform_indices = @transform_2, window_bounds = array<i64: 1, 128>}, {transform_indices = @transform_3, window_bounds = array<i64: 16, 128>}]} {
    %c0 = arith.constant 0 : index
    %c0_0 = arith.constant 0 : index
    %0 = vector.load %arg2[%c0, %c0_0] : memref<16x32xbf16, #tpu.memory_space<vmem>>, vector<16x32xbf16>
    %c0_1 = arith.constant 0 : index
    %c0_2 = arith.constant 0 : index
    %1 = vector.load %arg3[%c0_1, %c0_2] : memref<32x128xbf16, #tpu.memory_space<vmem>>, vector<32x128xbf16>
    %cst = arith.constant dense<0.000000e+00> : vector<16x128xf32>
    %2 = tpu.matmul %0, %1, %cst {dimension_numbers = #tpu.dot_dimension_numbers<[1], [0], [0], [1], [0, 0, 1, 1], [], []>} : vector<16x32xbf16>, vector<32x128xbf16>, vector<16x128xf32> -> vector<16x128xf32>
    %c0_3 = arith.constant 0 : index
    %c0_4 = arith.constant 0 : index
    %3 = vector.load %arg4[%c0_3, %c0_4] : memref<1x128xf32, #tpu.memory_space<vmem>>, vector<1x128xf32>
    %4 = vector.broadcast %3 : vector<1x128xf32> to vector<16x128xf32>
    %5 = arith.addf %2, %4 : vector<16x128xf32>
    %6 = math.tanh %5 : vector<16x128xf32>
    %c0_5 = arith.constant 0 : index
    %c0_6 = arith.constant 0 : index
    %7 = vector.load %arg5[%c0_5, %c0_6] : memref<16x128xf32, #tpu.memory_space<vmem>>, vector<16x128xf32>
    tpu.vector_store %arg5[%c0_5, %c0_6], %6 {strides = array<i32>} : memref<16x128xf32, #tpu.memory_space<vmem>>, vector<16x128xf32>,
    return
  }
  func.func @transform_0(%arg0: i32, %arg1: i32) -> (i32, i32) {
    %c0_i32 = arith.constant 0 : i32
    %c0_i32_0 = arith.constant 0 : i32
    return %arg0, %c0_i32 : i32, i32
  }
  func.func @transform_1(%arg0: i32, %arg1: i32) -> (i32, i32) {
    %c0_i32 = arith.constant 0 : i32
    %c0_i32_0 = arith.constant 0 : i32
    return %c0_i32, %arg1 : i32, i32
  }
  func.func @transform_2(%arg0: i32, %arg1: i32) -> (i32, i32) {
    %c0_i32 = arith.constant 0 : i32
    %c0_i32_0 = arith.constant 0 : i32
    return %c0_i32, %arg1 : i32, i32
  }
  func.func @transform_3(%arg0: i32, %arg1: i32) -> (i32, i32) {
    %c0_i32 = arith.constant 0 : i32
    return %arg0, %arg1 : i32, i32
  }
}

</mosaic_0001>

<llo_original>
// kernel: tpu_custom_call.1
$region0: #{tpu_custom_call.1}
  #allocation0 [shape = 'u32[]', space=smem, size = 0x4, offset = 0x4, fixed_abs, tag = 'smem constant byte address 0x4 - core index']
  #allocation1 [shape = 'u32[144,128]{1,0:T(1,128)}', space=vmem, size = 0x12000, scoped, tag = 'internal scratch']
  %s0 = inlined_call_operand.hbm [shape: bf16[16,32], index: 0, kind: input, shape index: {}]
  %s1 = inlined_call_operand.hbm [shape: bf16[32,128], index: 1, kind: input, shape index: {}]
  %s2 = inlined_call_operand.vmem [shape: f32[1,128], index: 2, kind: input, shape index: {}]
  %s3 = inlined_call_operand.hbm [shape: f32[16,128], index: 3, kind: output, shape index: {}]
  %s4 = sld [smem:[#allocation0]]
  $region30: #{tpu_custom_call.1} parent=0
    _
  %s6 = ssub.s32 1, %s4
  %s7 = scalar_select 0, %s6, %s4
  $region1: #{tpu_custom_call.1} parent=0
    #allocation2 [shape = 'u8[4096]{0}', space=vmem, size = 0x1000, scoped, tag = 'input window, operand 0, single buffered']
    #allocation3 [shape = 's32[1]{0}', space=sflag, size = 0x4, scoped, tag = 'scoped memory for tpu_custom_call.1']
    #allocation4 [shape = 's32[1]{0}', space=sflag, size = 0x4, scoped, tag = 'scoped memory for tpu_custom_call.1']
    #allocation5 [shape = 'u8[8192]{0}', space=vmem, size = 0x2000, scoped, tag = 'input window, operand 1, single buffered']
    #allocation6 [shape = 's32[1]{0}', space=sflag, size = 0x4, scoped, tag = 'scoped memory for tpu_custom_call.1']
    #allocation7 [shape = 'u8[8192]{0}', space=vmem, size = 0x2000, scoped, tag = 'output window, operand 0, single buffered']
    %8 = vsyncpa [#allocation3], 0
    %9 = vsyncpa [#allocation6], 0
    %10 = vsyncpa [#allocation4], 0
    // Predicated region
    $region2: #{tpu_custom_call.1} parent=1 // pred_check
      _
    $region3: #{tpu_custom_call.1} parent=1 // pred_check_branch
      %12 = sbr.rel (0) target = $region5
    $region4: #{tpu_custom_call.1} parent=1 // pred_region
      %s14 = ssub.s32 128, 128
      %15 = vsyncadd [#allocation3], %s14
      %s16 = sshll.u32 [#allocation2], 4
      %s17 = int_to_ptr.vmem [resolvable:$true] %s16
      %22 = dma.hbm_to_vmem [thread:$0]  %s0, 128, %s17, [#allocation3], 64, 64, 4
    $region5: #{tpu_custom_call.1} parent=1 // pred_fallthru
      _
    // Predicated region
    $region6: #{tpu_custom_call.1} parent=1 // pred_check
      _
    $region7: #{tpu_custom_call.1} parent=1 // pred_check_branch
      %24 = sbr.rel (0) target = $region9
    $region8: #{tpu_custom_call.1} parent=1 // pred_region
      %s26 = ssub.s32 256, 256
      %27 = vsyncadd [#allocation6], %s26
      %s28 = sshll.u32 [#allocation5], 4
      %s29 = int_to_ptr.vmem [resolvable:$true] %s28
      %34 = dma.hbm_to_vmem [thread:$0]  %s1, 256, %s29, [#allocation6], 64, 64, 4
    $region9: #{tpu_custom_call.1} parent=1 // pred_fallthru
      _
    // Predicated region
    $region10: #{tpu_custom_call.1} parent=1 // pred_check
      _
    $region11: #{tpu_custom_call.1} parent=1 // pred_check_branch
      %36 = sbr.rel (0) target = $region13
    $region12: #{tpu_custom_call.1} parent=1 // pred_region
      _
    $region13: #{tpu_custom_call.1} parent=1 // pred_fallthru
      _
    // Predicated region
    $region14: #{tpu_custom_call.1} parent=1 // pred_check
      _
    $region15: #{tpu_custom_call.1} parent=1 // pred_check_branch
      %38 = sbr.rel (0) target = $region17
    $region16: #{tpu_custom_call.1} parent=1 // pred_region
      %39 = dma.done [#allocation3], 128
    $region17: #{tpu_custom_call.1} parent=1 // pred_fallthru
      _
    // Predicated region
    $region18: #{tpu_custom_call.1} parent=1 // pred_check
      _
    $region19: #{tpu_custom_call.1} parent=1 // pred_check_branch
      %41 = sbr.rel (0) target = $region21
    $region20: #{tpu_custom_call.1} parent=1 // pred_region
      %42 = dma.done [#allocation6], 256
    $region21: #{tpu_custom_call.1} parent=1 // pred_fallthru
      _
    %v44 = vld [vmem:[#allocation2] sm:$0xf]
    %v45 = vld [vmem:[#allocation2 + $0x4] sm:$0xf]
    %v46 = vld [vmem:[#allocation5] sm:$0xf]
    %v47 = vld [vmem:[#allocation5 + $0x4] sm:$0xf]
    %v48 = vld [vmem:[#allocation5 + $0x8] sm:$0xf]
    %v49 = vld [vmem:[#allocation5 + $0xc] sm:$0xf]
    %v50 = vld [vmem:[%s2] sm:$0x1]
    %v52 = vlaneseq
    %v53 = vshrl.u32 %v52, 7
    %v54 = vsub.s32 0, %v53
    %v55 = vrot.slane %v50, %v54
    %v59 = vunpack.c.l.b16 %v44
    %v60 = vunpack.c.l.b16 %v45
    %v61 = vpack.c.b16 %v60, %v59
    %v66 = vunpack.c.l.b16 %v46
    %v67 = vunpack.c.l.b16 %v47
    %v68 = vunpack.c.l.b16 %v48
    %v69 = vunpack.c.l.b16 %v49
    %v70 = vpack.c.b16 %v67, %v66
    %v71 = vpack.c.b16 %v69, %v68
    %vm74 = vcmask 261120
    %v76 = vsel %vm74, %v61, 0
    %78 = vmatprep.subr.bf16.mxu0 0
    %79 = vmatpush1.bf16.msra.mxu0 %v70
    %80 = vmatprep.subr.bf16.mxu0 0
    %81 = vmatpush1.bf16.msra.mxu0 %v71
    %82 = vmatprep.subr.bf16.mxu0 0
    %83 = vmatpush1.bf16.msra.mxu0 0
    %84 = vmatprep.subr.bf16.mxu0 0
    %85 = vmatpush1.bf16.msra.mxu0 0
    %86 = vmatprep.subr.bf16.mxu0 0
    %87 = vmatpush1.bf16.msra.mxu0 0
    %88 = vmatprep.subr.bf16.mxu0 0
    %89 = vmatpush1.bf16.msra.mxu0 0
    %90 = vmatprep.subr.bf16.mxu0 0
    %91 = vmatpush1.bf16.msra.mxu0 0
    %92 = vmatprep.subr.bf16.mxu0 0
    %93 = vmatpush1.bf16.msra.mxu0 0
    %94 = vmatprep.subr.bf16.mxu0 0
    %95 = vmatpush1.bf16.msra.mxu0 0
    %96 = vmatprep.subr.bf16.mxu0 0
    %97 = vmatpush1.bf16.msra.mxu0 0
    %98 = vmatprep.subr.bf16.mxu0 0
    %99 = vmatpush1.bf16.msra.mxu0 0
    %100 = vmatprep.subr.bf16.mxu0 0
    %101 = vmatpush1.bf16.msra.mxu0 0
    %102 = vmatprep.subr.bf16.mxu0 0
    %103 = vmatpush1.bf16.msra.mxu0 0
    %104 = vmatprep.subr.bf16.mxu0 0
    %105 = vmatpush1.bf16.msra.mxu0 0
    %106 = vmatprep.subr.bf16.mxu0 0
    %107 = vmatpush1.bf16.msra.mxu0 0
    %108 = vmatprep.subr.bf16.mxu0 0
    %109 = vmatpush1.bf16.msra.mxu0 0
    %110 = vmatprep.mubr.bf16.mxu0 0
    %111 = vmatmul.mubr.bf16.gmra.mrb[0].mxu0 %v76
    %v112 = vpop.f32.mrb[0].mxu0
    %v113 = vadd.f32 %v55, %v112
    %v114 = vpop.f32.mrb[0].mxu0
    %v115 = vpop.f32.mrb[0].mxu0
    %v116 = vadd.f32 %v55, %v115
    %v117 = vpop.f32.mrb[0].mxu0
    %118 = vdwg.mxu0
    %v119 = vtanh.pop %v113
    %v120 = vtanh.pop %v116
    %121 = vst [vmem:[#allocation7] sm:$0xff] %v119
    %122 = vst [vmem:[#allocation7 + $0x8] sm:$0xff] %v120
    // Predicated region
    $region22: #{tpu_custom_call.1} parent=1 // pred_check
      _
    $region23: #{tpu_custom_call.1} parent=1 // pred_check_branch
      %124 = sbr.rel (0) target = $region25
    $region24: #{tpu_custom_call.1} parent=1 // pred_region
      %s126 = ssub.s32 256, 256
      %127 = vsyncadd [#allocation4], %s126
      %s128 = sshll.u32 [#allocation7], 4
      %s129 = int_to_ptr.vmem [resolvable:$true] %s128
      %134 = dma.vmem_to_hbm [thread:$0]  %s129, 256, %s3, [#allocation4], 128, 128, 8
    $region25: #{tpu_custom_call.1} parent=1 // pred_fallthru
      _
    // Predicated region
    $region26: #{tpu_custom_call.1} parent=1 // pred_check
      _
    $region27: #{tpu_custom_call.1} parent=1 // pred_check_branch
      %136 = sbr.rel (0) target = $region29
    $region28: #{tpu_custom_call.1} parent=1 // pred_region
      %137 = dma.done [#allocation4], 256
    $region29: #{tpu_custom_call.1} parent=1 // pred_fallthru
      _
    %138 = vsyncpa [#allocation3], 1
    %139 = vsyncpa [#allocation6], 1
    %140 = vsyncpa [#allocation4], 1

</llo_original>
